<compile_context>
chip_gen: v7x
topology: tpu7x:2x2x1
jax: 0.10.0
libtpu: 0.0.40
codegen_flags: <defaults>
</compile_context>

<pallas_src>
import math

import jax
import jax.numpy as jnp
from jax.experimental import pallas as pl
from jax.experimental.pallas import tpu as pltpu


# <=8 MiB per block: with 2 specs x 2 pipeline buffers this is <=32 MiB
# resident, leaving headroom on v7x's 64 MiB VMEM and well within v5e/v6e.
_BLOCK_BYTES_CAP = 8 * 1024 * 1024
_VMEM_LIMIT_BYTES = 48 * 1024 * 1024
# Above this size we force >=2 grid steps so v7x's two TensorCores both work.
_SPLIT_BYTES = 2 * 1024 * 1024


def _copy_kernel(x_ref, o_ref):
    # Lane-dense pass-through of the current (row_block, lanes) VMEM tile.
    o_ref[...] = x_ref[...]


def _sublane_pack(dtype) -> int:
    """Rows per packed vreg sublane group: 8 (f32), 16 (bf16), 32 (i8/fp8)."""
    itemsize = jnp.dtype(dtype).itemsize
    return 8 * max(1, 4 // itemsize)


def _round_up(x: int, m: int) -> int:
    return ((x + m - 1) // m) * m


def rect_conv2d_pallas_identity(x: jax.Array) -> jax.Array:
    """Tiled lane-dense identity copy of `x` via a Pallas TPU kernel."""
    orig_shape = x.shape
    total = int(math.prod(orig_shape)) if orig_shape else 1
    dtype_bytes = jnp.dtype(x.dtype).itemsize
    pack = _sublane_pack(x.dtype)

    # Lane-dense layout: wide multiple-of-128 last dim (prefer >=512 so
    # stores are unmasked full-lane vst, not vst.msk partials).
    lanes = 512 if total >= 512 else 128

    # Pad the flattened array up to a (pack-aligned rows) x lanes slab so the
    # BlockSpec is always (8,128)-legal and no whole-array fallback exists.
    rows = _round_up(pl.cdiv(total, lanes), pack)
    padded = rows * lanes
    flat = x.reshape(-1)
    if padded != total:
        flat = jnp.pad(flat, (0, padded - total))
    x2 = flat.reshape(rows, lanes)

    # Row block: sublane-pack aligned, capped at ~8 MiB per block.
    max_rows = max(pack, (_BLOCK_BYTES_CAP // (lanes * dtype_bytes)) // pack * pack)
    row_block = min(max_rows, rows)

    # For multi-MiB inputs make sure there are >=2 grid steps so the
    # "parallel" axis can shard across v7x's two TensorCores.
    total_bytes = rows * lanes * dtype_bytes
    if total_bytes >= _SPLIT_BYTES and pl.cdiv(rows, row_block) < 2:
        row_block = max(pack, _round_up(pl.cdiv(rows, 2), pack))

    grid = (pl.cdiv(rows, row_block),)

    out2 = pl.pallas_call(
        _copy_kernel,
        out_shape=jax.ShapeDtypeStruct((rows, lanes), x.dtype),
        grid_spec=pltpu.PrefetchScalarGridSpec(
            num_scalar_prefetch=0,
            grid=grid,
            in_specs=[pl.BlockSpec((row_block, lanes), lambda i: (i, 0))],
            out_specs=pl.BlockSpec((row_block, lanes), lambda i: (i, 0)),
        ),
        compiler_params=pltpu.CompilerParams(
            # "parallel" lets multi-step grids shard across v7x's 2 TCs;
            # harmless on single-core v5e/v6e.
            dimension_semantics=("parallel",),
            vmem_limit_bytes=_VMEM_LIMIT_BYTES,
        ),
    )(x2)

    out_flat = out2.reshape(-1)
    if padded != total:
        out_flat = out_flat[:total]
    return out_flat.reshape(orig_shape)


def rect_conv2d_forward(x: jax.Array, *, materialize: bool = False) -> jax.Array:
    """Pallas port of RectConv2d.forward.

    The reference forward is a no-op (`pass`), so the default (and fastest)
    path returns the input untouched -- zero HBM traffic.  Set
    `materialize=True` to route through the Pallas identity-copy kernel when
    a freshly materialized output buffer is contractually required.
    """
    if materialize:
        return rect_conv2d_pallas_identity(x)
    return x


if __name__ == "__main__":
    key = jax.random.PRNGKey(0)

    # Small NCHW input consistent with a conv2d-style module.
    x = jax.random.normal(key, (2, 4, 16, 16), dtype=jnp.float32)

    # Fast (default) path: pure pass-through.
    out_fast = jax.block_until_ready(rect_conv2d_forward(x))
    assert out_fast.shape == x.shape and out_fast.dtype == x.dtype

    # Pallas identity-copy kernel path.
    out = jax.block_until_ready(rect_conv2d_forward(x, materialize=True))
    assert out.shape == x.shape and out.dtype == x.dtype
    assert bool(jnp.allclose(out, x))

    # Awkward (non-128-multiple) shape exercises the padded-slab path.
    y = jax.random.normal(jax.random.PRNGKey(1), (2, 3, 5, 7), dtype=jnp.float32)
    out_y = jax.block_until_ready(rect_conv2d_pallas_identity(y))
    assert out_y.shape == y.shape and bool(jnp.allclose(out_y, y))

    print("KERNEL_OK")
</pallas_src>

<mosaic_0001>
module attributes {stable_mosaic.version = 11 : i64} {
  func.func @_copy_kernel(%arg0: i32, %arg1: memref<8x512xf32, #tpu.memory_space<vmem>>, %arg2: memref<8x512xf32, #tpu.memory_space<vmem>>) attributes {dimension_semantics = [#tpu.dimension_semantics<parallel>], iteration_bounds = array<i64: 1>, scalar_prefetch = 0 : i64, scratch_operands = 0 : i64, tpu.core_type = #tpu.core_type<tc>, window_params = [{transform_indices = @transform_0, window_bounds = array<i64: 8, 512>}, {transform_indices = @transform_1, window_bounds = array<i64: 8, 512>}]} {
    %c0 = arith.constant 0 : index
    %c0_0 = arith.constant 0 : index
    %0 = vector.load %arg1[%c0, %c0_0] : memref<8x512xf32, #tpu.memory_space<vmem>>, vector<8x512xf32>
    %c0_1 = arith.constant 0 : index
    %c0_2 = arith.constant 0 : index
    %1 = vector.load %arg2[%c0_1, %c0_2] : memref<8x512xf32, #tpu.memory_space<vmem>>, vector<8x512xf32>
    tpu.vector_store %arg2[%c0_1, %c0_2], %0 {strides = array<i32>} : memref<8x512xf32, #tpu.memory_space<vmem>>, vector<8x512xf32>,
    return
  }
  func.func @transform_0(%arg0: i32) -> (i32, i32) {
    %c0_i32 = arith.constant 0 : i32
    %c0_i32_0 = arith.constant 0 : i32
    return %arg0, %c0_i32 : i32, i32
  }
  func.func @transform_1(%arg0: i32) -> (i32, i32) {
    %c0_i32 = arith.constant 0 : i32
    %c0_i32_0 = arith.constant 0 : i32
    return %arg0, %c0_i32 : i32, i32
  }
}

</mosaic_0001>

<llo_original>
// kernel: tpu_custom_call.1
$region0: #{tpu_custom_call.1}
  #allocation0 [shape = 'u32[]', space=smem, size = 0x4, offset = 0x4, fixed_abs, tag = 'smem constant byte address 0x4 - core index']
  #allocation1 [shape = 'u32[144,128]{1,0:T(1,128)}', space=vmem, size = 0x12000, scoped, tag = 'internal scratch']
  %s0 = inlined_call_operand.hbm [shape: f32[8,512], index: 0, kind: input, shape index: {}]
  %s1 = inlined_call_operand.hbm [shape: f32[8,512], index: 1, kind: output, shape index: {}]
  %s2 = sld [smem:[#allocation0]]
  $region18: #{tpu_custom_call.1} parent=0
    _
  %s4 = ssub.s32 1, %s2
  %s5 = scalar_select 0, %s4, %s2
  $region1: #{tpu_custom_call.1} parent=0
    #allocation2 [shape = 'u8[16384]{0}', space=vmem, size = 0x4000, scoped, tag = 'input window, operand 0, single buffered']
    #allocation3 [shape = 's32[1]{0}', space=sflag, size = 0x4, scoped, tag = 'scoped memory for tpu_custom_call.1']
    #allocation4 [shape = 's32[1]{0}', space=sflag, size = 0x4, scoped, tag = 'scoped memory for tpu_custom_call.1']
    #allocation5 [shape = 'u8[16384]{0}', space=vmem, size = 0x4000, scoped, tag = 'output window, operand 0, single buffered']
    %6 = vsyncpa [#allocation3], 0
    %7 = vsyncpa [#allocation4], 0
    // Predicated region
    $region2: #{tpu_custom_call.1} parent=1 // pred_check
      _
    $region3: #{tpu_custom_call.1} parent=1 // pred_check_branch
      %9 = sbr.rel (0) target = $region5
    $region4: #{tpu_custom_call.1} parent=1 // pred_region
      %s11 = ssub.s32 512, 512
      %12 = vsyncadd [#allocation3], %s11
      %s14 = sshll.u32 [#allocation2], 4
      %s15 = int_to_ptr.vmem [resolvable:$true] %s14
      %17 = dma.hbm_to_vmem [thread:$0]  %s0, 512, %s15, [#allocation3]
    $region5: #{tpu_custom_call.1} parent=1 // pred_fallthru
      _
    // Predicated region
    $region6: #{tpu_custom_call.1} parent=1 // pred_check
      _
    $region7: #{tpu_custom_call.1} parent=1 // pred_check_branch
      %19 = sbr.rel (0) target = $region9
    $region8: #{tpu_custom_call.1} parent=1 // pred_region
      %20 = dma.done [#allocation3], 512
    $region9: #{tpu_custom_call.1} parent=1 // pred_fallthru
      _
    %v21 = vld [vmem:[#allocation2] sm:$0xff]
    %v22 = vld [vmem:[#allocation2 + $0x8] sm:$0xff]
    %v23 = vld [vmem:[#allocation2 + $0x10] sm:$0xff]
    %v24 = vld [vmem:[#allocation2 + $0x18] sm:$0xff]
    %25 = vst [vmem:[#allocation5] sm:$0xff] %v21
    %26 = vst [vmem:[#allocation5 + $0x8] sm:$0xff] %v22
    %27 = vst [vmem:[#allocation5 + $0x10] sm:$0xff] %v23
    %28 = vst [vmem:[#allocation5 + $0x18] sm:$0xff] %v24
    // Predicated region
    $region10: #{tpu_custom_call.1} parent=1 // pred_check
      _
    $region11: #{tpu_custom_call.1} parent=1 // pred_check_branch
      %30 = sbr.rel (0) target = $region13
    $region12: #{tpu_custom_call.1} parent=1 // pred_region
      %s32 = ssub.s32 512, 512
      %33 = vsyncadd [#allocation4], %s32
      %s35 = sshll.u32 [#allocation5], 4
      %s36 = int_to_ptr.vmem [resolvable:$true] %s35
      %38 = dma.vmem_to_hbm [thread:$0]  %s36, 512, %s1, [#allocation4]
    $region13: #{tpu_custom_call.1} parent=1 // pred_fallthru
      _
    // Predicated region
    $region14: #{tpu_custom_call.1} parent=1 // pred_check
      _
    $region15: #{tpu_custom_call.1} parent=1 // pred_check_branch
      %40 = sbr.rel (0) target = $region17
    $region16: #{tpu_custom_call.1} parent=1 // pred_region
      %41 = dma.done [#allocation4], 512
    $region17: #{tpu_custom_call.1} parent=1 // pred_fallthru
      _
    %42 = vsyncpa [#allocation3], 1
    %43 = vsyncpa [#allocation4], 1

</llo_original>
